<compile_context>
chip_gen: v6e
topology: v6e:2x2x1
jax: 0.10.0
libtpu: 0.0.40
codegen_flags: <defaults>
</compile_context>

<pallas_src>
import functools
import math

import jax
import jax.numpy as jnp
from jax.experimental import pallas as pl
from jax.experimental.pallas import tpu as pltpu

_INV_LN10 = 1.0 / math.log(10.0)


def _entropy_partial_kernel(x_ref, o_ref, *, batch, block_rows, need_mask):
    # x_ref: (block_rows, C) tile of logits; o_ref: (1, 1, 1) per-tile partial
    # sum of p * ln(p) over the tile's valid rows.
    x = x_ref[...].astype(jnp.float32)

    # Numerically stable softmax statistics along the class (lane) axis.
    m = jnp.max(x, axis=1, keepdims=True)             # (tb, 1)  XLU
    shifted = x - m                                   # (tb, C)  VPU
    e = jnp.exp(shifted)                              # (tb, C)  EUP
    s = jnp.sum(e, axis=1, keepdims=True)             # (tb, 1)  XLU
    t = jnp.sum(e * shifted, axis=1, keepdims=True)   # (tb, 1)  VPU + XLU

    # Per-row sum_j p_j * ln p_j = T/S - ln S  (no [tb, C] divide, no per-element log).
    row_ent = t * pl.reciprocal(s, approx=True) - jnp.log(s)   # (tb, 1)

    if need_mask:
        # Zero contributions from padded rows of the ragged last tile.
        row = (jax.lax.broadcasted_iota(jnp.int32, (block_rows, 1), 0)
               + pl.program_id(0) * block_rows)
        row_ent = jnp.where(row < batch, row_ent, 0.0)

    o_ref[...] = jnp.sum(row_ent, axis=0, keepdims=True).reshape(1, 1, 1)


def _pick_block_rows(batch, classes, itemsize):
    # Target ~8 MiB per input buffer; BlockSpec double-buffers the input so the
    # live footprint is ~16 MiB, which fits the scoped-VMEM limit we request on
    # v5e (16 MiB default raised to 32), v6e (32) and v7x (32 of 64 physical).
    budget = 8 * 1024 * 1024
    tb = budget // max(1, classes * itemsize)
    tb = max(8, min(1024, tb))
    tb -= tb % 8                      # sublane (8, ...) block constraint
    return batch if tb >= batch else tb


def entropy(x, *, block_rows=None):
    """sum(softmax(x, 1) * log10(softmax(x, 1))) for 2-D logits x[B, C]."""
    assert x.ndim == 2, "Entropy kernel expects [batch, classes] logits"
    batch, classes = x.shape
    if block_rows is None:
        block_rows = _pick_block_rows(batch, classes, jnp.dtype(x.dtype).itemsize)
    num_tiles = pl.cdiv(batch, block_rows)
    need_mask = (batch % block_rows) != 0

    kernel = functools.partial(
        _entropy_partial_kernel,
        batch=batch, block_rows=block_rows, need_mask=need_mask)

    # TODO(synk): for vocab-sized C, also tile the class axis with an online
    # (flash-style) max/sum carry so the working set stays block_rows x TC.
    partials = pl.pallas_call(
        kernel,
        out_shape=jax.ShapeDtypeStruct((num_tiles, 1, 1), jnp.float32),
        grid=(num_tiles,),
        in_specs=[pl.BlockSpec((block_rows, classes), lambda i: (i, 0))],
        out_specs=pl.BlockSpec((1, 1, 1), lambda i: (i, 0, 0)),
        compiler_params=pltpu.CompilerParams(
            dimension_semantics=("parallel",),   # independent tiles -> v7x megacore
            vmem_limit_bytes=32 * 1024 * 1024,
        ),
    )(x)

    # Hoisted base-10 conversion + reduction of the tiny per-tile partials.
    return jnp.sum(partials) * _INV_LN10


def _reference(x):
    p = jax.nn.softmax(x.astype(jnp.float32), axis=1)
    return jnp.sum(p * (jnp.log(p) * _INV_LN10))


if __name__ == "__main__":
    key = jax.random.PRNGKey(0)
    k1, k2 = jax.random.split(key)

    # InfoGAN-style categorical logits: batch=8, classes=10 (softmax over dim=1).
    x1 = jax.random.normal(k1, (8, 10), dtype=jnp.float32)
    r1 = jax.block_until_ready(entropy(x1))
    ref1 = _reference(x1)
    # Tolerance loosened slightly vs. exact f32 because the per-row 1/S uses the
    # approximate EUP reciprocal (per perf review).
    assert jnp.allclose(r1, ref1, rtol=2e-3, atol=2e-3), (r1, ref1)

    # Exercise the multi-tile grid + ragged-row masking path (20 rows, tile=8).
    x2 = jax.random.normal(k2, (20, 16), dtype=jnp.float32)
    r2 = jax.block_until_ready(entropy(x2, block_rows=8))
    ref2 = _reference(x2)
    assert jnp.allclose(r2, ref2, rtol=2e-3, atol=2e-3), (r2, ref2)

    print("KERNEL_OK")
</pallas_src>

<mosaic_0001>
module attributes {stable_mosaic.version = 11 : i64} {
  func.func @_entropy_partial_kernel(%arg0: i32, %arg1: memref<8x10xf32, #tpu.memory_space<vmem>>, %arg2: memref<1x1x1xf32, #tpu.memory_space<vmem>>) attributes {dimension_semantics = [#tpu.dimension_semantics<parallel>], iteration_bounds = array<i64: 1>, scalar_prefetch = 0 : i64, scratch_operands = 0 : i64, tpu.core_type = #tpu.core_type<tc>, window_params = [{transform_indices = @transform_0, window_bounds = array<i64: 8, 10>}, {transform_indices = @transform_1, window_bounds = array<i64: 1, 1, 1>}]} {
    %c0 = arith.constant 0 : index
    %c0_0 = arith.constant 0 : index
    %0 = vector.load %arg1[%c0, %c0_0] : memref<8x10xf32, #tpu.memory_space<vmem>>, vector<8x10xf32>
    %cst = arith.constant dense<0xFF800000> : vector<8xf32>
    %1 = vector.multi_reduction <maximumf>, %0, %cst [1] : vector<8x10xf32> to vector<8xf32>
    %2 = vector.shape_cast %1 : vector<8xf32> to vector<8x1xf32>
    %3 = vector.broadcast %2 : vector<8x1xf32> to vector<8x10xf32>
    %4 = arith.subf %0, %3 : vector<8x10xf32>
    %5 = math.exp %4 : vector<8x10xf32>
    %cst_1 = arith.constant dense<0.000000e+00> : vector<8xf32>
    %6 = vector.multi_reduction <add>, %5, %cst_1 [1] : vector<8x10xf32> to vector<8xf32>
    %7 = vector.shape_cast %6 : vector<8xf32> to vector<8x1xf32>
    %8 = arith.mulf %5, %4 : vector<8x10xf32>
    %cst_2 = arith.constant dense<0.000000e+00> : vector<8xf32>
    %9 = vector.multi_reduction <add>, %8, %cst_2 [1] : vector<8x10xf32> to vector<8xf32>
    %10 = vector.shape_cast %9 : vector<8xf32> to vector<8x1xf32>
    %11 = tpu.reciprocal %7 {approx = true} : vector<8x1xf32> -> vector<8x1xf32>
    %12 = arith.mulf %10, %11 : vector<8x1xf32>
    %13 = math.log %7 : vector<8x1xf32>
    %14 = arith.subf %12, %13 : vector<8x1xf32>
    %cst_3 = arith.constant dense<0.000000e+00> : vector<1xf32>
    %15 = vector.multi_reduction <add>, %14, %cst_3 [0] : vector<8x1xf32> to vector<1xf32>
    %16 = vector.shape_cast %15 : vector<1xf32> to vector<1x1xf32>
    %17 = vector.shape_cast %16 : vector<1x1xf32> to vector<1x1x1xf32>
    %c0_4 = arith.constant 0 : index
    %c0_5 = arith.constant 0 : index
    %c0_6 = arith.constant 0 : index
    %18 = vector.load %arg2[%c0_4, %c0_5, %c0_6] : memref<1x1x1xf32, #tpu.memory_space<vmem>>, vector<1x1x1xf32>
    tpu.vector_store %arg2[%c0_4, %c0_5, %c0_6], %17 {strides = array<i32>} : memref<1x1x1xf32, #tpu.memory_space<vmem>>, vector<1x1x1xf32>,
    return
  }
  func.func @transform_0(%arg0: i32) -> (i32, i32) {
    %c0_i32 = arith.constant 0 : i32
    %c0_i32_0 = arith.constant 0 : i32
    return %arg0, %c0_i32 : i32, i32
  }
  func.func @transform_1(%arg0: i32) -> (i32, i32, i32) {
    %c0_i32 = arith.constant 0 : i32
    %c0_i32_0 = arith.constant 0 : i32
    %c0_i32_1 = arith.constant 0 : i32
    return %arg0, %c0_i32, %c0_i32_0 : i32, i32, i32
  }
}

</mosaic_0001>

<llo_original>
// kernel: tpu_custom_call.1
$region0: #{tpu_custom_call.1}
  #allocation0 [shape = 'u32[]', space=smem, size = 0x4, offset = 0x4, fixed_abs, tag = 'smem constant byte address 0x4 - core index']
  #allocation1 [shape = 'u32[144,128]{1,0:T(1,128)}', space=vmem, size = 0x12000, scoped, tag = 'internal scratch']
  %s0 = inlined_call_operand.hbm [shape: f32[8,10], index: 0, kind: input, shape index: {}]
  %s1 = inlined_call_operand.hbm [shape: f32[1,1,1], index: 1, kind: output, shape index: {}]
  %s2 = sld [smem:[#allocation0]]
  $region18: #{tpu_custom_call.1} parent=0
    _
  %s4 = ssub.s32 1, %s2
  %s5 = scalar_select 0, %s4, %s2
  $region1: #{tpu_custom_call.1} parent=0
    #allocation2 [shape = 'u8[4096]{0}', space=vmem, size = 0x1000, scoped, tag = 'input window, operand 0, single buffered']
    #allocation3 [shape = 's32[1]{0}', space=sflag, size = 0x4, scoped, tag = 'scoped memory for tpu_custom_call.1']
    #allocation4 [shape = 's32[1]{0}', space=sflag, size = 0x4, scoped, tag = 'scoped memory for tpu_custom_call.1']
    #allocation5 [shape = 'u8[512]{0}', space=vmem, size = 0x400, scoped, tag = 'output window, operand 0, single buffered']
    %6 = vsyncpa [#allocation3], 0
    %7 = vsyncpa [#allocation4], 0
    // Predicated region
    $region2: #{tpu_custom_call.1} parent=1 // pred_check
      _
    $region3: #{tpu_custom_call.1} parent=1 // pred_check_branch
      %9 = sbr.rel (0) target = $region5
    $region4: #{tpu_custom_call.1} parent=1 // pred_region
      %s11 = ssub.s32 128, 128
      %12 = vsyncadd [#allocation3], %s11
      %s14 = sshll.u32 [#allocation2], 4
      %s15 = int_to_ptr.vmem [resolvable:$true] %s14
      %17 = dma.hbm_to_vmem [thread:$0]  %s0, 128, %s15, [#allocation3]
    $region5: #{tpu_custom_call.1} parent=1 // pred_fallthru
      _
    // Predicated region
    $region6: #{tpu_custom_call.1} parent=1 // pred_check
      _
    $region7: #{tpu_custom_call.1} parent=1 // pred_check_branch
      %19 = sbr.rel (0) target = $region9
    $region8: #{tpu_custom_call.1} parent=1 // pred_region
      %20 = dma.done [#allocation3], 128
    $region9: #{tpu_custom_call.1} parent=1 // pred_fallthru
      _
    %v21 = vld [vmem:[#allocation2] sm:$0xff]
    %vm22 = vcmask 80896
    %v23 = vsel %vm22, %v21, -inf
    %24 = vmax.xlane.f32.xlu0 %v23
    %v25 = vpop.xlane.xlu0 %24
    %v26 = vsub.f32 %v21, %v25
    %v27 = vmul.f32 %v26, 1.442695
    %v28 = vpow.pop %v27
    %v29 = vsel %vm22, %v28, 0.0
    %30 = vadd.xlane.f32.xlu0 %v29
    %v31 = vpop.xlane.xlu0 %30
    %v32 = vmul.f32 %v28, %v26
    %v33 = vsel %vm22, %v32, 0.0
    %34 = vadd.xlane.f32.xlu0 %v33
    %v35 = vpop.xlane.xlu0 %34
    %v36 = vrcp.pop %v31
    %v37 = vmul.f32 %v35, %v36
    %v38 = vlog2.pop %v31
    %v39 = vmul.f32 %v38, 0.6931472
    %v40 = vsub.f32 %v37, %v39
    %v41 = vrot.slane %v40, 4
    %v42 = vadd.f32 %v40, %v41
    %v43 = vrot.slane %v42, 2
    %v44 = vadd.f32 %v42, %v43
    %v45 = vrot.slane %v44, 1
    %v46 = vadd.f32 %v44, %v45
    %vm47 = vcmask 0
    %48 = vst.msk [vmem:[#allocation5] sm:$0x1] %vm47, %v46
    // Predicated region
    $region10: #{tpu_custom_call.1} parent=1 // pred_check
      _
    $region11: #{tpu_custom_call.1} parent=1 // pred_check_branch
      %50 = sbr.rel (0) target = $region13
    $region12: #{tpu_custom_call.1} parent=1 // pred_region
      %s52 = ssub.s32 16, 16
      %53 = vsyncadd [#allocation4], %s52
      %s55 = sshll.u32 [#allocation5], 4
      %s56 = int_to_ptr.vmem [resolvable:$true] %s55
      %58 = dma.vmem_to_hbm [thread:$0]  %s56, 16, %s1, [#allocation4]
    $region13: #{tpu_custom_call.1} parent=1 // pred_fallthru
      _
    // Predicated region
    $region14: #{tpu_custom_call.1} parent=1 // pred_check
      _
    $region15: #{tpu_custom_call.1} parent=1 // pred_check_branch
      %60 = sbr.rel (0) target = $region17
    $region16: #{tpu_custom_call.1} parent=1 // pred_region
      %61 = dma.done [#allocation4], 16
    $region17: #{tpu_custom_call.1} parent=1 // pred_fallthru
      _
    %62 = vsyncpa [#allocation3], 1
    %63 = vsyncpa [#allocation4], 1

</llo_original>
